<compile_context>
chip_gen: v5e
topology: v5e:2x2
jax: 0.10.0
libtpu: 0.0.40
codegen_flags: <defaults>
</compile_context>

<pallas_src>
import functools

import jax
import jax.numpy as jnp
from jax.experimental import pallas as pl
from jax.experimental.pallas import tpu as pltpu

INPUT_SIZE = 784
HIDDEN = 50
NUM_CLASSES = 10

HIDDEN_PAD = 128        # lane-dense hidden width (zero-padded from 50)
OUT_PAD = 128           # lane-dense output width (zero-padded from 10)
DEFAULT_TILE_B = 2048   # amortizes per-step overhead; fits 48 MiB scoped VMEM
VMEM_LIMIT_BYTES = 48 * 1024 * 1024  # < v7x's 64 MiB physical, > v5e's 16 MiB default


def _round_up(x, m):
    return ((x + m - 1) // m) * m


def mlp_kernel(x_ref, w1_ref, b1_ref, w2_ref, b2_ref, w3_ref, b3_ref,
               w4_ref, b4_ref, o_ref):
    # x_ref: (TILE_B, 784) f32 (cast to bf16 here); weights bf16 (in, out);
    # biases f32 (1, out). Matmuls: bf16 x bf16 -> f32 accumulate on the MXU.
    # Bias add + tanh stay in f32; final store is bf16 (lane-dense, 128 wide).
    x = x_ref[...].astype(jnp.bfloat16)
    h = jnp.tanh(
        jnp.dot(x, w1_ref[...], preferred_element_type=jnp.float32) + b1_ref[...])
    h = jnp.tanh(
        jnp.dot(h.astype(jnp.bfloat16), w2_ref[...],
                preferred_element_type=jnp.float32) + b2_ref[...])
    h = jnp.tanh(
        jnp.dot(h.astype(jnp.bfloat16), w3_ref[...],
                preferred_element_type=jnp.float32) + b3_ref[...])
    o_ref[...] = (
        jnp.dot(h.astype(jnp.bfloat16), w4_ref[...],
                preferred_element_type=jnp.float32) + b4_ref[...]
    ).astype(o_ref.dtype)


def init_params(key):
    """Deterministic init mimicking nn.Linear's U(-1/sqrt(fan_in), 1/sqrt(fan_in)).
    Weights stored as (in, out) = torch weight.T. Logical (unpadded) shapes."""
    dims = [(INPUT_SIZE, HIDDEN), (HIDDEN, HIDDEN), (HIDDEN, HIDDEN),
            (HIDDEN, NUM_CLASSES)]
    params = {}
    for i, (fan_in, fan_out) in enumerate(dims, start=1):
        key, kw, kb = jax.random.split(key, 3)
        bound = 1.0 / jnp.sqrt(jnp.float32(fan_in))
        params[f"w{i}"] = jax.random.uniform(
            kw, (fan_in, fan_out), jnp.float32, -bound, bound)
        params[f"b{i}"] = jax.random.uniform(
            kb, (1, fan_out), jnp.float32, -bound, bound)
    return params


def prepare_params(params):
    """Zero-pad hidden/output dims to lane-dense widths. Call ONCE, reuse.

    Zero padding keeps the math exact: padded hidden columns get pre-activation
    0 (zero weight column + zero bias), tanh(0) = 0, and the corresponding
    downstream weight rows are zero so they contribute nothing.
    Weights are cast to bf16 (matmul inputs); biases stay f32.
    """
    def pad_w(w, rows, cols):
        r, c = w.shape
        return jnp.pad(w, ((0, rows - r), (0, cols - c))).astype(jnp.bfloat16)

    def pad_b(b, cols):
        return jnp.pad(b, ((0, 0), (0, cols - b.shape[1]))).astype(jnp.float32)

    pp = {
        "w1": pad_w(params["w1"], INPUT_SIZE, HIDDEN_PAD),
        "b1": pad_b(params["b1"], HIDDEN_PAD),
        "w2": pad_w(params["w2"], HIDDEN_PAD, HIDDEN_PAD),
        "b2": pad_b(params["b2"], HIDDEN_PAD),
        "w3": pad_w(params["w3"], HIDDEN_PAD, HIDDEN_PAD),
        "b3": pad_b(params["b3"], HIDDEN_PAD),
        "w4": pad_w(params["w4"], HIDDEN_PAD, OUT_PAD),
        "b4": pad_b(params["b4"], OUT_PAD),
    }
    return jax.tree_util.tree_map(jax.block_until_ready, pp)


@functools.partial(jax.jit, static_argnames=("tile_b",))
def _forward_jit(x, w1, b1, w2, b2, w3, b3, w4, b4, *, tile_b):
    """x: (B, 784) f32. Returns (B, NUM_CLASSES) f32 logits."""
    B = x.shape[0]
    B_pad = _round_up(B, tile_b)
    if B_pad != B:
        x = jnp.pad(x, ((0, B_pad - B), (0, 0)))
    grid = (B_pad // tile_b,)

    weight_bytes = sum(int(v.size) * v.dtype.itemsize
                       for v in (w1, b1, w2, b2, w3, b3, w4, b4))
    cost = pl.CostEstimate(
        flops=2 * B_pad * (INPUT_SIZE * HIDDEN_PAD
                           + 2 * HIDDEN_PAD * HIDDEN_PAD
                           + HIDDEN_PAD * OUT_PAD),
        transcendentals=3 * B_pad * HIDDEN_PAD,
        bytes_accessed=(B_pad * INPUT_SIZE * 4       # x streamed as f32
                        + B_pad * OUT_PAD * 2        # bf16 output
                        + weight_bytes),
    )

    # x / out are tiled over the batch grid (double-buffered HBM streaming);
    # weights and biases use constant index_maps and single buffers so they
    # stay VMEM-resident with no wasted second buffer.
    resident = dict(pipeline_mode=pl.Buffered(1))
    in_specs = [
        pl.BlockSpec((tile_b, INPUT_SIZE), lambda i: (i, 0)),                    # x (f32)
        pl.BlockSpec((INPUT_SIZE, HIDDEN_PAD), lambda i: (0, 0), **resident),    # w1
        pl.BlockSpec((1, HIDDEN_PAD), lambda i: (0, 0), **resident),             # b1
        pl.BlockSpec((HIDDEN_PAD, HIDDEN_PAD), lambda i: (0, 0), **resident),    # w2
        pl.BlockSpec((1, HIDDEN_PAD), lambda i: (0, 0), **resident),             # b2
        pl.BlockSpec((HIDDEN_PAD, HIDDEN_PAD), lambda i: (0, 0), **resident),    # w3
        pl.BlockSpec((1, HIDDEN_PAD), lambda i: (0, 0), **resident),             # b3
        pl.BlockSpec((HIDDEN_PAD, OUT_PAD), lambda i: (0, 0), **resident),       # w4
        pl.BlockSpec((1, OUT_PAD), lambda i: (0, 0), **resident),                # b4
    ]

    out = pl.pallas_call(
        mlp_kernel,
        out_shape=jax.ShapeDtypeStruct((B_pad, OUT_PAD), jnp.bfloat16),
        grid=grid,
        in_specs=in_specs,
        out_specs=pl.BlockSpec((tile_b, OUT_PAD), lambda i: (i, 0)),
        compiler_params=pltpu.CompilerParams(
            dimension_semantics=("parallel",),
            vmem_limit_bytes=VMEM_LIMIT_BYTES),
        cost_estimate=cost,
    )(x, w1, b1, w2, b2, w3, b3, w4, b4)

    return out[:B, :NUM_CLASSES].astype(jnp.float32)


def nn_forward(x, padded_params, tile_b=DEFAULT_TILE_B):
    """x: (B, 784) float32; padded_params: output of prepare_params."""
    B = x.shape[0]
    # Batch tile: multiple of 8, no larger than needed for small B.
    tile_b = max(8, min(tile_b, _round_up(B, 8)))
    pp = padded_params
    return _forward_jit(x, pp["w1"], pp["b1"], pp["w2"], pp["b2"],
                        pp["w3"], pp["b3"], pp["w4"], pp["b4"], tile_b=tile_b)


def reference_forward_f32(x, params):
    h = jnp.tanh(x @ params["w1"] + params["b1"])
    h = jnp.tanh(h @ params["w2"] + params["b2"])
    h = jnp.tanh(h @ params["w3"] + params["b3"])
    return h @ params["w4"] + params["b4"]


def reference_forward_mixed(x, params):
    """Mirrors the kernel's precision: bf16 matmul inputs, f32 accumulate/activations."""
    def mm(a, w):
        return jnp.dot(a.astype(jnp.bfloat16), w.astype(jnp.bfloat16),
                       preferred_element_type=jnp.float32)
    h = jnp.tanh(mm(x, params["w1"]) + params["b1"])
    h = jnp.tanh(mm(h, params["w2"]) + params["b2"])
    h = jnp.tanh(mm(h, params["w3"]) + params["b3"])
    return mm(h, params["w4"]) + params["b4"]


if __name__ == "__main__":
    key = jax.random.PRNGKey(0)
    key, kx = jax.random.split(key)
    B = 2
    x = jax.random.normal(kx, (B, INPUT_SIZE), jnp.float32)
    params = init_params(key)
    padded = prepare_params(params)   # one-time padding + bf16 cast

    out = nn_forward(x, padded)
    out = jax.block_until_ready(out)
    assert out.shape == (B, NUM_CLASSES)

    # Check against a precision-matched reference (bf16 matmul inputs + bf16
    # output store) and the pure-f32 reference (looser).
    ref_mixed = reference_forward_mixed(x, params)
    ref_f32 = reference_forward_f32(x, params)
    assert jnp.allclose(out, ref_mixed, atol=2e-2, rtol=2e-2), \
        f"max err vs mixed ref: {jnp.max(jnp.abs(out - ref_mixed))}"
    assert jnp.allclose(out, ref_f32, atol=5e-2, rtol=5e-2), \
        f"max err vs f32 ref: {jnp.max(jnp.abs(out - ref_f32))}"

    print("KERNEL_OK")
</pallas_src>

<mosaic_0001>
module attributes {stable_mosaic.version = 11 : i64} {
  func.func @mlp_kernel(%arg0: i32, %arg1: memref<8x784xf32, #tpu.memory_space<vmem>>, %arg2: memref<784x128xbf16, #tpu.memory_space<vmem>>, %arg3: memref<1x128xf32, #tpu.memory_space<vmem>>, %arg4: memref<128x128xbf16, #tpu.memory_space<vmem>>, %arg5: memref<1x128xf32, #tpu.memory_space<vmem>>, %arg6: memref<128x128xbf16, #tpu.memory_space<vmem>>, %arg7: memref<1x128xf32, #tpu.memory_space<vmem>>, %arg8: memref<128x128xbf16, #tpu.memory_space<vmem>>, %arg9: memref<1x128xf32, #tpu.memory_space<vmem>>, %arg10: memref<8x128xbf16, #tpu.memory_space<vmem>>) attributes {dimension_semantics = [#tpu.dimension_semantics<parallel>], iteration_bounds = array<i64: 1>, scalar_prefetch = 0 : i64, scratch_operands = 0 : i64, tpu.core_type = #tpu.core_type<tc>, window_params = [{transform_indices = @transform_0, window_bounds = array<i64: 8, 784>}, {pipeline_mode = #tpu.pipeline_mode<synchronous>, transform_indices = @transform_1, window_bounds = array<i64: 784, 128>}, {pipeline_mode = #tpu.pipeline_mode<synchronous>, transform_indices = @transform_2, window_bounds = array<i64: 1, 128>}, {pipeline_mode = #tpu.pipeline_mode<synchronous>, transform_indices = @transform_3, window_bounds = array<i64: 128, 128>}, {pipeline_mode = #tpu.pipeline_mode<synchronous>, transform_indices = @transform_4, window_bounds = array<i64: 1, 128>}, {pipeline_mode = #tpu.pipeline_mode<synchronous>, transform_indices = @transform_5, window_bounds = array<i64: 128, 128>}, {pipeline_mode = #tpu.pipeline_mode<synchronous>, transform_indices = @transform_6, window_bounds = array<i64: 1, 128>}, {pipeline_mode = #tpu.pipeline_mode<synchronous>, transform_indices = @transform_7, window_bounds = array<i64: 128, 128>}, {pipeline_mode = #tpu.pipeline_mode<synchronous>, transform_indices = @transform_8, window_bounds = array<i64: 1, 128>}, {transform_indices = @transform_9, window_bounds = array<i64: 8, 128>}]} {
    %c0 = arith.constant 0 : index
    %c0_0 = arith.constant 0 : index
    %0 = vector.load %arg1[%c0, %c0_0] : memref<8x784xf32, #tpu.memory_space<vmem>>, vector<8x784xf32>
    %1 = arith.truncf %0 : vector<8x784xf32> to vector<8x784xbf16>
    %c0_1 = arith.constant 0 : index
    %c0_2 = arith.constant 0 : index
    %2 = vector.load %arg2[%c0_1, %c0_2] : memref<784x128xbf16, #tpu.memory_space<vmem>>, vector<784x128xbf16>
    %cst = arith.constant dense<0.000000e+00> : vector<8x128xf32>
    %3 = tpu.matmul %1, %2, %cst {dimension_numbers = #tpu.dot_dimension_numbers<[1], [0], [0], [1], [0, 0, 1, 1], [], []>} : vector<8x784xbf16>, vector<784x128xbf16>, vector<8x128xf32> -> vector<8x128xf32>
    %c0_3 = arith.constant 0 : index
    %c0_4 = arith.constant 0 : index
    %4 = vector.load %arg3[%c0_3, %c0_4] : memref<1x128xf32, #tpu.memory_space<vmem>>, vector<1x128xf32>
    %5 = vector.broadcast %4 : vector<1x128xf32> to vector<8x128xf32>
    %6 = arith.addf %3, %5 : vector<8x128xf32>
    %7 = math.tanh %6 : vector<8x128xf32>
    %8 = arith.truncf %7 : vector<8x128xf32> to vector<8x128xbf16>
    %c0_5 = arith.constant 0 : index
    %c0_6 = arith.constant 0 : index
    %9 = vector.load %arg4[%c0_5, %c0_6] : memref<128x128xbf16, #tpu.memory_space<vmem>>, vector<128x128xbf16>
    %cst_7 = arith.constant dense<0.000000e+00> : vector<8x128xf32>
    %10 = tpu.matmul %8, %9, %cst_7 {dimension_numbers = #tpu.dot_dimension_numbers<[1], [0], [0], [1], [0, 0, 1, 1], [], []>} : vector<8x128xbf16>, vector<128x128xbf16>, vector<8x128xf32> -> vector<8x128xf32>
    %c0_8 = arith.constant 0 : index
    %c0_9 = arith.constant 0 : index
    %11 = vector.load %arg5[%c0_8, %c0_9] : memref<1x128xf32, #tpu.memory_space<vmem>>, vector<1x128xf32>
    %12 = vector.broadcast %11 : vector<1x128xf32> to vector<8x128xf32>
    %13 = arith.addf %10, %12 : vector<8x128xf32>
    %14 = math.tanh %13 : vector<8x128xf32>
    %15 = arith.truncf %14 : vector<8x128xf32> to vector<8x128xbf16>
    %c0_10 = arith.constant 0 : index
    %c0_11 = arith.constant 0 : index
    %16 = vector.load %arg6[%c0_10, %c0_11] : memref<128x128xbf16, #tpu.memory_space<vmem>>, vector<128x128xbf16>
    %cst_12 = arith.constant dense<0.000000e+00> : vector<8x128xf32>
    %17 = tpu.matmul %15, %16, %cst_12 {dimension_numbers = #tpu.dot_dimension_numbers<[1], [0], [0], [1], [0, 0, 1, 1], [], []>} : vector<8x128xbf16>, vector<128x128xbf16>, vector<8x128xf32> -> vector<8x128xf32>
    %c0_13 = arith.constant 0 : index
    %c0_14 = arith.constant 0 : index
    %18 = vector.load %arg7[%c0_13, %c0_14] : memref<1x128xf32, #tpu.memory_space<vmem>>, vector<1x128xf32>
    %19 = vector.broadcast %18 : vector<1x128xf32> to vector<8x128xf32>
    %20 = arith.addf %17, %19 : vector<8x128xf32>
    %21 = math.tanh %20 : vector<8x128xf32>
    %22 = arith.truncf %21 : vector<8x128xf32> to vector<8x128xbf16>
    %c0_15 = arith.constant 0 : index
    %c0_16 = arith.constant 0 : index
    %23 = vector.load %arg8[%c0_15, %c0_16] : memref<128x128xbf16, #tpu.memory_space<vmem>>, vector<128x128xbf16>
    %cst_17 = arith.constant dense<0.000000e+00> : vector<8x128xf32>
    %24 = tpu.matmul %22, %23, %cst_17 {dimension_numbers = #tpu.dot_dimension_numbers<[1], [0], [0], [1], [0, 0, 1, 1], [], []>} : vector<8x128xbf16>, vector<128x128xbf16>, vector<8x128xf32> -> vector<8x128xf32>
    %c0_18 = arith.constant 0 : index
    %c0_19 = arith.constant 0 : index
    %25 = vector.load %arg9[%c0_18, %c0_19] : memref<1x128xf32, #tpu.memory_space<vmem>>, vector<1x128xf32>
    %26 = vector.broadcast %25 : vector<1x128xf32> to vector<8x128xf32>
    %27 = arith.addf %24, %26 : vector<8x128xf32>
    %28 = arith.truncf %27 : vector<8x128xf32> to vector<8x128xbf16>
    %c0_20 = arith.constant 0 : index
    %c0_21 = arith.constant 0 : index
    %29 = vector.load %arg10[%c0_20, %c0_21] : memref<8x128xbf16, #tpu.memory_space<vmem>>, vector<8x128xbf16>
    tpu.vector_store %arg10[%c0_20, %c0_21], %28 {strides = array<i32>} : memref<8x128xbf16, #tpu.memory_space<vmem>>, vector<8x128xbf16>,
    return
  }
  func.func @transform_0(%arg0: i32) -> (i32, i32) {
    %c0_i32 = arith.constant 0 : i32
    %c0_i32_0 = arith.constant 0 : i32
    return %arg0, %c0_i32 : i32, i32
  }
  func.func @transform_1(%arg0: i32) -> (i32, i32) {
    %c0_i32 = arith.constant 0 : i32
    %c0_i32_0 = arith.constant 0 : i32
    %c0_i32_1 = arith.constant 0 : i32
    return %c0_i32, %c0_i32_0 : i32, i32
  }
  func.func @transform_2(%arg0: i32) -> (i32, i32) {
    %c0_i32 = arith.constant 0 : i32
    %c0_i32_0 = arith.constant 0 : i32
    %c0_i32_1 = arith.constant 0 : i32
    return %c0_i32, %c0_i32_0 : i32, i32
  }
  func.func @transform_3(%arg0: i32) -> (i32, i32) {
    %c0_i32 = arith.constant 0 : i32
    %c0_i32_0 = arith.constant 0 : i32
    %c0_i32_1 = arith.constant 0 : i32
    return %c0_i32, %c0_i32_0 : i32, i32
  }
  func.func @transform_4(%arg0: i32) -> (i32, i32) {
    %c0_i32 = arith.constant 0 : i32
    %c0_i32_0 = arith.constant 0 : i32
    %c0_i32_1 = arith.constant 0 : i32
    return %c0_i32, %c0_i32_0 : i32, i32
  }
  func.func @transform_5(%arg0: i32) -> (i32, i32) {
    %c0_i32 = arith.constant 0 : i32
    %c0_i32_0 = arith.constant 0 : i32
    %c0_i32_1 = arith.constant 0 : i32
    return %c0_i32, %c0_i32_0 : i32, i32
  }
  func.func @transform_6(%arg0: i32) -> (i32, i32) {
    %c0_i32 = arith.constant 0 : i32
    %c0_i32_0 = arith.constant 0 : i32
    %c0_i32_1 = arith.constant 0 : i32
    return %c0_i32, %c0_i32_0 : i32, i32
  }
  func.func @transform_7(%arg0: i32) -> (i32, i32) {
    %c0_i32 = arith.constant 0 : i32
    %c0_i32_0 = arith.constant 0 : i32
    %c0_i32_1 = arith.constant 0 : i32
    return %c0_i32, %c0_i32_0 : i32, i32
  }
  func.func @transform_8(%arg0: i32) -> (i32, i32) {
    %c0_i32 = arith.constant 0 : i32
    %c0_i32_0 = arith.constant 0 : i32
    %c0_i32_1 = arith.constant 0 : i32
    return %c0_i32, %c0_i32_0 : i32, i32
  }
  func.func @transform_9(%arg0: i32) -> (i32, i32) {
    %c0_i32 = arith.constant 0 : i32
    %c0_i32_0 = arith.constant 0 : i32
    return %arg0, %c0_i32 : i32, i32
  }
}

</mosaic_0001>

<llo_original>
// kernel: _forward_jit.1
$region0: #{_forward_jit.1}
  #allocation0 [shape = 'u32[]', space=smem, size = 0x4, offset = 0x4, fixed_abs, tag = 'smem constant byte address 0x4 - core index']
  #allocation1 [shape = 'u32[72,128]{1,0:T(1,128)}', space=vmem, size = 0x9000, scoped, tag = 'internal scratch']
  %s0 = inlined_call_operand.vmem [shape: f32[8,784], index: 0, kind: input, shape index: {}]
  %s1 = inlined_call_operand.hbm [shape: bf16[784,128], index: 1, kind: input, shape index: {}]
  %s2 = inlined_call_operand.vmem [shape: f32[1,128], index: 2, kind: input, shape index: {}]
  %s3 = inlined_call_operand.vmem [shape: bf16[128,128], index: 3, kind: input, shape index: {}]
  %s4 = inlined_call_operand.vmem [shape: f32[1,128], index: 4, kind: input, shape index: {}]
  %s5 = inlined_call_operand.hbm [shape: bf16[128,128], index: 5, kind: input, shape index: {}]
  %s6 = inlined_call_operand.vmem [shape: f32[1,128], index: 6, kind: input, shape index: {}]
  %s7 = inlined_call_operand.hbm [shape: bf16[128,128], index: 7, kind: input, shape index: {}]
  %s8 = inlined_call_operand.vmem [shape: f32[1,128], index: 8, kind: input, shape index: {}]
  %s9 = inlined_call_operand.vmem [shape: bf16[8,128], index: 9, kind: output, shape index: {}]
  %s10 = sld [smem:[#allocation0]]
  $region58: #{_forward_jit.1} parent=0
    _
  %s12 = ssub.s32 1, %s10
  %s13 = scalar_select 0, %s12, %s10
  $region1: #{_forward_jit.1} parent=0
    #allocation2 [shape = 'u8[200704]{0}', space=vmem, size = 0x31000, scoped, tag = 'input window, operand 1, single buffered']
    #allocation3 [shape = 's32[1]{0}', space=sflag, size = 0x4, scoped, tag = 'scoped memory for _forward_jit.1']
    #allocation4 [shape = 'u8[32768]{0}', space=vmem, size = 0x8000, scoped, tag = 'input window, operand 5, single buffered']
    #allocation5 [shape = 's32[1]{0}', space=sflag, size = 0x4, scoped, tag = 'scoped memory for _forward_jit.1']
    #allocation6 [shape = 'u8[32768]{0}', space=vmem, size = 0x8000, scoped, tag = 'input window, operand 7, single buffered']
    %14 = vsyncpa [#allocation3], 0
    %15 = vsyncpa [#allocation5], 0
    // Predicated region
    $region2: #{_forward_jit.1} parent=1 // pred_check
      _
    $region3: #{_forward_jit.1} parent=1 // pred_check_branch
      %17 = sbr.rel (0) target = $region5
    $region4: #{_forward_jit.1} parent=1 // pred_region
      _
    $region5: #{_forward_jit.1} parent=1 // pred_fallthru
      _
    // Predicated region
    $region6: #{_forward_jit.1} parent=1 // pred_check
      _
    $region7: #{_forward_jit.1} parent=1 // pred_check_branch
      %19 = sbr.rel (0) target = $region9
    $region8: #{_forward_jit.1} parent=1 // pred_region
      %21 = vsyncadd [#allocation3], 0
      %s22 = sshll.u32 %s1, 4
      %s23 = int_to_ptr.hbm [resolvable:$true] %s22
      %s24 = sshll.u32 [#allocation2], 4
      %s25 = int_to_ptr.vmem [resolvable:$true] %s24
      %30 = dma.hbm_to_vmem [thread:$0]  %s23, 6272, %s25, [#allocation3], 64, 64, 4
    $region9: #{_forward_jit.1} parent=1 // pred_fallthru
      _
    // Predicated region
    $region10: #{_forward_jit.1} parent=1 // pred_check
      _
    $region11: #{_forward_jit.1} parent=1 // pred_check_branch
      %32 = sbr.rel (0) target = $region13
    $region12: #{_forward_jit.1} parent=1 // pred_region
      _
    $region13: #{_forward_jit.1} parent=1 // pred_fallthru
      _
    // Predicated region
    $region14: #{_forward_jit.1} parent=1 // pred_check
      _
    $region15: #{_forward_jit.1} parent=1 // pred_check_branch
      %34 = sbr.rel (0) target = $region17
    $region16: #{_forward_jit.1} parent=1 // pred_region
      _
    $region17: #{_forward_jit.1} parent=1 // pred_fallthru
      _
    // Predicated region
    $region18: #{_forward_jit.1} parent=1 // pred_check
      _
    $region19: #{_forward_jit.1} parent=1 // pred_check_branch
      %36 = sbr.rel (0) target = $region21
    $region20: #{_forward_jit.1} parent=1 // pred_region
      _
    $region21: #{_forward_jit.1} parent=1 // pred_fallthru
      _
    // Predicated region
    $region22: #{_forward_jit.1} parent=1 // pred_check
      _
    $region23: #{_forward_jit.1} parent=1 // pred_check_branch
      %38 = sbr.rel (0) target = $region25
    $region24: #{_forward_jit.1} parent=1 // pred_region
      %40 = vsyncadd [#allocation5], 0
      %s41 = sshll.u32 %s5, 4
      %s42 = int_to_ptr.hbm [resolvable:$true] %s41
      %s43 = sshll.u32 [#allocation4], 4
      %s44 = int_to_ptr.vmem [resolvable:$true] %s43
      %49 = dma.hbm_to_vmem [thread:$0]  %s42, 1024, %s44, [#allocation5], 64, 64, 4
    $region25: #{_forward_jit.1} parent=1 // pred_fallthru
      _
    // Predicated region
    $region26: #{_forward_jit.1} parent=1 // pred_check
      _
    $region27: #{_forward_jit.1} parent=1 // pred_check_branch
      %51 = sbr.rel (0) target = $region29
    $region28: #{_forward_jit.1} parent=1 // pred_region
      _
    $region29: #{_forward_jit.1} parent=1 // pred_fallthru
      _
    // Predicated region
    $region30: #{_forward_jit.1} parent=1 // pred_check
      _
    $region31: #{_forward_jit.1} parent=1 // pred_check_branch
      %53 = sbr.rel (0) target = $region33
    $region32: #{_forward_jit.1} parent=1 // pred_region
      %55 = vsyncadd [#allocation5], 0
      %s56 = sshll.u32 %s7, 4
      %s57 = int_to_ptr.hbm [resolvable:$true] %s56
      %s58 = sshll.u32 [#allocation6], 4
      %s59 = int_to_ptr.vmem [resolvable:$true] %s58
      %64 = dma.hbm_to_vmem [thread:$0]  %s57, 1024, %s59, [#allocation5], 64, 64, 4
    $region33: #{_forward_jit.1} parent=1 // pred_fallthru
      _
    // Predicated region
    $region34: #{_forward_jit.1} parent=1 // pred_check
      _
    $region35: #{_forward_jit.1} parent=1 // pred_check_branch
      %66 = sbr.rel (0) target = $region37
    $region36: #{_forward_jit.1} parent=1 // pred_region
      _
    $region37: #{_forward_jit.1} parent=1 // pred_fallthru
      _
    // Predicated region
    $region38: #{_forward_jit.1} parent=1 // pred_check
      _
    $region39: #{_forward_jit.1} parent=1 // pred_check_branch
      %68 = sbr.rel (0) target = $region41
    $region40: #{_forward_jit.1} parent=1 // pred_region
      %70 = dma.done [#allocation3], 6272
    $region41: #{_forward_jit.1} parent=1 // pred_fallthru
      _
    // Predicated region
    $region42: #{_forward_jit.1} parent=1 // pred_check
      _
    $region43: #{_forward_jit.1} parent=1 // pred_check_branch
      %72 = sbr.rel (0) target = $region45
    $region44: #{_forward_jit.1} parent=1 // pred_region
      %74 = dma.done [#allocation5], 1024
    $region45: #{_forward_jit.1} parent=1 // pred_fallthru
      _
    // Predicated region
    $region46: #{_forward_jit.1} parent=1 // pred_check
      _
    $region47: #{_forward_jit.1} parent=1 // pred_check_branch
      %76 = sbr.rel (0) target = $region49
    $region48: #{_forward_jit.1} parent=1 // pred_region
      %78 = dma.done [#allocation5], 1024
    $region49: #{_forward_jit.1} parent=1 // pred_fallthru
      _
    %v80 = vld [vmem:[%s0] sm:$0xff]
    %v81 = vld [vmem:[%s0 + $0x8] sm:$0xff]
    %v82 = vld [vmem:[%s0 + $0x10] sm:$0xff]
    %v83 = vld [vmem:[%s0 + $0x18] sm:$0xff]
    %v84 = vld [vmem:[%s0 + $0x20] sm:$0xff]
    %v85 = vld [vmem:[%s0 + $0x28] sm:$0xff]
    %v86 = vld [vmem:[%s0 + $0x30] sm:$0xff]
    %v87 = vpack.c.bf16 %v80, %v80
    %v88 = vpack.c.bf16 %v81, %v81
    %v89 = vpack.c.bf16 %v82, %v82
    %v90 = vpack.c.bf16 %v83, %v83
    %v91 = vpack.c.bf16 %v84, %v84
    %v92 = vpack.c.bf16 %v85, %v85
    %v93 = vpack.c.bf16 %v86, %v86
    %v94 = vld [vmem:[#allocation2] sm:$0xf]
    %v95 = vld [vmem:[#allocation2 + $0x4] sm:$0xf]
    %v96 = vld [vmem:[#allocation2 + $0x8] sm:$0xf]
    %v97 = vld [vmem:[#allocation2 + $0xc] sm:$0xf]
    %v98 = vld [vmem:[#allocation2 + $0x10] sm:$0xf]
    %v99 = vld [vmem:[#allocation2 + $0x14] sm:$0xf]
    %v100 = vld [vmem:[#allocation2 + $0x18] sm:$0xf]
    %v101 = vld [vmem:[#allocation2 + $0x1c] sm:$0xf]
    %v102 = vld [vmem:[#allocation2 + $0x20] sm:$0xf]
    %v103 = vld [vmem:[#allocation2 + $0x24] sm:$0xf]
    %v104 = vld [vmem:[#allocation2 + $0x28] sm:$0xf]
    %v105 = vld [vmem:[#allocation2 + $0x2c] sm:$0xf]
    %v106 = vld [vmem:[#allocation2 + $0x30] sm:$0xf]
    %v107 = vld [vmem:[#allocation2 + $0x34] sm:$0xf]
    %v108 = vld [vmem:[#allocation2 + $0x38] sm:$0xf]
    %v109 = vld [vmem:[#allocation2 + $0x3c] sm:$0xf]
    %v110 = vld [vmem:[#allocation2 + $0x40] sm:$0xf]
    %v111 = vld [vmem:[#allocation2 + $0x44] sm:$0xf]
    %v112 = vld [vmem:[#allocation2 + $0x48] sm:$0xf]
    %v113 = vld [vmem:[#allocation2 + $0x4c] sm:$0xf]
    %v114 = vld [vmem:[#allocation2 + $0x50] sm:$0xf]
    %v115 = vld [vmem:[#allocation2 + $0x54] sm:$0xf]
    %v116 = vld [vmem:[#allocation2 + $0x58] sm:$0xf]
    %v117 = vld [vmem:[#allocation2 + $0x5c] sm:$0xf]
    %v118 = vld [vmem:[#allocation2 + $0x60] sm:$0xf]
    %v119 = vld [vmem:[#allocation2 + $0x64] sm:$0xf]
    %v120 = vld [vmem:[#allocation2 + $0x68] sm:$0xf]
    %v121 = vld [vmem:[#allocation2 + $0x6c] sm:$0xf]
    %v122 = vld [vmem:[#allocation2 + $0x70] sm:$0xf]
    %v123 = vld [vmem:[#allocation2 + $0x74] sm:$0xf]
    %v124 = vld [vmem:[#allocation2 + $0x78] sm:$0xf]
    %v125 = vld [vmem:[#allocation2 + $0x7c] sm:$0xf]
    %v126 = vld [vmem:[#allocation2 + $0x80] sm:$0xf]
    %v127 = vld [vmem:[#allocation2 + $0x84] sm:$0xf]
    %v128 = vld [vmem:[#allocation2 + $0x88] sm:$0xf]
    %v129 = vld [vmem:[#allocation2 + $0x8c] sm:$0xf]
    %v130 = vld [vmem:[#allocation2 + $0x90] sm:$0xf]
    %v131 = vld [vmem:[#allocation2 + $0x94] sm:$0xf]
    %v132 = vld [vmem:[#allocation2 + $0x98] sm:$0xf]
    %v133 = vld [vmem:[#allocation2 + $0x9c] sm:$0xf]
    %v134 = vld [vmem:[#allocation2 + $0xa0] sm:$0xf]
    %v135 = vld [vmem:[#allocation2 + $0xa4] sm:$0xf]
    %v136 = vld [vmem:[#allocation2 + $0xa8] sm:$0xf]
    %v137 = vld [vmem:[#allocation2 + $0xac] sm:$0xf]
    %v138 = vld [vmem:[#allocation2 + $0xb0] sm:$0xf]
    %v139 = vld [vmem:[#allocation2 + $0xb4] sm:$0xf]
    %v140 = vld [vmem:[#allocation2 + $0xb8] sm:$0xf]
    %v141 = vld [vmem:[#allocation2 + $0xbc] sm:$0xf]
    %v142 = vld [vmem:[#allocation2 + $0xc0] sm:$0xf]
    %v143 = vld [vmem:[#allocation2 + $0xc4] sm:$0xf]
    %v144 = vld [vmem:[#allocation2 + $0xc8] sm:$0xf]
    %v145 = vld [vmem:[#allocation2 + $0xcc] sm:$0xf]
    %v146 = vld [vmem:[#allocation2 + $0xd0] sm:$0xf]
    %v147 = vld [vmem:[#allocation2 + $0xd4] sm:$0xf]
    %v148 = vld [vmem:[#allocation2 + $0xd8] sm:$0xf]
    %v149 = vld [vmem:[#allocation2 + $0xdc] sm:$0xf]
    %v150 = vld [vmem:[#allocation2 + $0xe0] sm:$0xf]
    %v151 = vld [vmem:[#allocation2 + $0xe4] sm:$0xf]
    %v152 = vld [vmem:[#allocation2 + $0xe8] sm:$0xf]
    %v153 = vld [vmem:[#allocation2 + $0xec] sm:$0xf]
    %v154 = vld [vmem:[#allocation2 + $0xf0] sm:$0xf]
    %v155 = vld [vmem:[#allocation2 + $0xf4] sm:$0xf]
    %v156 = vld [vmem:[#allocation2 + $0xf8] sm:$0xf]
    %v157 = vld [vmem:[#allocation2 + $0xfc] sm:$0xf]
    %v158 = vld [vmem:[#allocation2 + $0x100] sm:$0xf]
    %v159 = vld [vmem:[#allocation2 + $0x104] sm:$0xf]
    %v160 = vld [vmem:[#allocation2 + $0x108] sm:$0xf]
    %v161 = vld [vmem:[#allocation2 + $0x10c] sm:$0xf]
    %v162 = vld [vmem:[#allocation2 + $0x110] sm:$0xf]
    %v163 = vld [vmem:[#allocation2 + $0x114] sm:$0xf]
    %v164 = vld [vmem:[#allocation2 + $0x118] sm:$0xf]
    %v165 = vld [vmem:[#allocation2 + $0x11c] sm:$0xf]
    %v166 = vld [vmem:[#allocation2 + $0x120] sm:$0xf]
    %v167 = vld [vmem:[#allocation2 + $0x124] sm:$0xf]
    %v168 = vld [vmem:[#allocation2 + $0x128] sm:$0xf]
    %v169 = vld [vmem:[#allocation2 + $0x12c] sm:$0xf]
    %v170 = vld [vmem:[#allocation2 + $0x130] sm:$0xf]
    %v171 = vld [vmem:[#allocation2 + $0x134] sm:$0xf]
    %v172 = vld [vmem:[#allocation2 + $0x138] sm:$0xf]
    %v173 = vld [vmem:[#allocation2 + $0x13c] sm:$0xf]
    %v174 = vld [vmem:[#allocation2 + $0x140] sm:$0xf]
    %v175 = vld [vmem:[#allocation2 + $0x144] sm:$0xf]
    %v176 = vld [vmem:[#allocation2 + $0x148] sm:$0xf]
    %v177 = vld [vmem:[#allocation2 + $0x14c] sm:$0xf]
    %v178 = vld [vmem:[#allocation2 + $0x150] sm:$0xf]
    %v179 = vld [vmem:[#allocation2 + $0x154] sm:$0xf]
    %v180 = vld [vmem:[#allocation2 + $0x158] sm:$0xf]
    %v181 = vld [vmem:[#allocation2 + $0x15c] sm:$0xf]
    %v182 = vld [vmem:[#allocation2 + $0x160] sm:$0xf]
    %v183 = vld [vmem:[#allocation2 + $0x164] sm:$0xf]
    %v184 = vld [vmem:[#allocation2 + $0x168] sm:$0xf]
    %v185 = vld [vmem:[#allocation2 + $0x16c] sm:$0xf]
    %v186 = vld [vmem:[#allocation2 + $0x170] sm:$0xf]
    %v187 = vld [vmem:[#allocation2 + $0x174] sm:$0xf]
    %v188 = vld [vmem:[#allocation2 + $0x178] sm:$0xf]
    %v189 = vld [vmem:[#allocation2 + $0x17c] sm:$0xf]
    %v190 = vld [vmem:[#allocation2 + $0x180] sm:$0xf]
    %v191 = vld [vmem:[#allocation2 + $0x184] sm:$0xf]
    %v192 = vld [vmem:[%s2] sm:$0x1]
    %v194 = vperm.slane %v192, 0
    %v294 = vunpack.c.l.b16 %v94
    %v295 = vunpack.c.l.b16 %v95
    %v296 = vunpack.c.l.b16 %v96
    %v297 = vunpack.c.l.b16 %v97
    %v298 = vunpack.c.l.b16 %v98
    %v299 = vunpack.c.l.b16 %v99
    %v300 = vunpack.c.l.b16 %v100
    %v301 = vunpack.c.l.b16 %v101
    %v302 = vunpack.c.l.b16 %v102
    %v303 = vunpack.c.l.b16 %v103
    %v304 = vunpack.c.l.b16 %v104
    %v305 = vunpack.c.l.b16 %v105
    %v306 = vunpack.c.l.b16 %v106
    %v307 = vunpack.c.l.b16 %v107
    %v308 = vunpack.c.l.b16 %v108
    %v309 = vunpack.c.l.b16 %v109
    %v310 = vunpack.c.l.b16 %v110
    %v311 = vunpack.c.l.b16 %v111
    %v312 = vunpack.c.l.b16 %v112
    %v313 = vunpack.c.l.b16 %v113
    %v314 = vunpack.c.l.b16 %v114
    %v315 = vunpack.c.l.b16 %v115
    %v316 = vunpack.c.l.b16 %v116
    %v317 = vunpack.c.l.b16 %v117
    %v318 = vunpack.c.l.b16 %v118
    %v319 = vunpack.c.l.b16 %v119
    %v320 = vunpack.c.l.b16 %v120
    %v321 = vunpack.c.l.b16 %v121
    %v322 = vunpack.c.l.b16 %v122
    %v323 = vunpack.c.l.b16 %v123
    %v324 = vunpack.c.l.b16 %v124
    %v325 = vunpack.c.l.b16 %v125
    %v326 = vunpack.c.l.b16 %v126
    %v327 = vunpack.c.l.b16 %v127
    %v328 = vunpack.c.l.b16 %v128
    %v329 = vunpack.c.l.b16 %v129
    %v330 = vunpack.c.l.b16 %v130
    %v331 = vunpack.c.l.b16 %v131
    %v332 = vunpack.c.l.b16 %v132
    %v333 = vunpack.c.l.b16 %v133
    %v334 = vunpack.c.l.b16 %v134
    %v335 = vunpack.c.l.b16 %v135
    %v336 = vunpack.c.l.b16 %v136
    %v337 = vunpack.c.l.b16 %v137
    %v338 = vunpack.c.l.b16 %v138
    %v339 = vunpack.c.l.b16 %v139
    %v340 = vunpack.c.l.b16 %v140
    %v341 = vunpack.c.l.b16 %v141
    %v342 = vunpack.c.l.b16 %v142
    %v343 = vunpack.c.l.b16 %v143
    %v344 = vunpack.c.l.b16 %v144
    %v345 = vunpack.c.l.b16 %v145
    %v346 = vunpack.c.l.b16 %v146
    %v347 = vunpack.c.l.b16 %v147
    %v348 = vunpack.c.l.b16 %v148
    %v349 = vunpack.c.l.b16 %v149
    %v350 = vunpack.c.l.b16 %v150
    %v351 = vunpack.c.l.b16 %v151
    %v352 = vunpack.c.l.b16 %v152
    %v353 = vunpack.c.l.b16 %v153
    %v354 = vunpack.c.l.b16 %v154
    %v355 = vunpack.c.l.b16 %v155
    %v356 = vunpack.c.l.b16 %v156
    %v357 = vunpack.c.l.b16 %v157
    %v358 = vunpack.c.l.b16 %v158
    %v359 = vunpack.c.l.b16 %v159
    %v360 = vunpack.c.l.b16 %v160
    %v361 = vunpack.c.l.b16 %v161
    %v362 = vunpack.c.l.b16 %v162
    %v363 = vunpack.c.l.b16 %v163
    %v364 = vunpack.c.l.b16 %v164
    %v365 = vunpack.c.l.b16 %v165
    %v366 = vunpack.c.l.b16 %v166
    %v367 = vunpack.c.l.b16 %v167
    %v368 = vunpack.c.l.b16 %v168
    %v369 = vunpack.c.l.b16 %v169
    %v370 = vunpack.c.l.b16 %v170
    %v371 = vunpack.c.l.b16 %v171
    %v372 = vunpack.c.l.b16 %v172
    %v373 = vunpack.c.l.b16 %v173
    %v374 = vunpack.c.l.b16 %v174
    %v375 = vunpack.c.l.b16 %v175
    %v376 = vunpack.c.l.b16 %v176
    %v377 = vunpack.c.l.b16 %v177
    %v378 = vunpack.c.l.b16 %v178
    %v379 = vunpack.c.l.b16 %v179
    %v380 = vunpack.c.l.b16 %v180
    %v381 = vunpack.c.l.b16 %v181
    %v382 = vunpack.c.l.b16 %v182
    %v383 = vunpack.c.l.b16 %v183
    %v384 = vunpack.c.l.b16 %v184
    %v385 = vunpack.c.l.b16 %v185
    %v386 = vunpack.c.l.b16 %v186
    %v387 = vunpack.c.l.b16 %v187
    %v388 = vunpack.c.l.b16 %v188
    %v389 = vunpack.c.l.b16 %v189
    %v390 = vunpack.c.l.b16 %v190
    %v391 = vunpack.c.l.b16 %v191
    %v392 = vpack.c.b16 %v295, %v294
    %v393 = vpack.c.b16 %v297, %v296
    %v394 = vpack.c.b16 %v299, %v298
    %v395 = vpack.c.b16 %v301, %v300
    %v396 = vpack.c.b16 %v303, %v302
    %v397 = vpack.c.b16 %v305, %v304
    %v398 = vpack.c.b16 %v307, %v306
    %v399 = vpack.c.b16 %v309, %v308
    %v400 = vpack.c.b16 %v311, %v310
    %v401 = vpack.c.b16 %v313, %v312
    %v402 = vpack.c.b16 %v315, %v314
    %v403 = vpack.c.b16 %v317, %v316
    %v404 = vpack.c.b16 %v319, %v318
    %v405 = vpack.c.b16 %v321, %v320
    %v406 = vpack.c.b16 %v323, %v322
    %v407 = vpack.c.b16 %v325, %v324
    %v408 = vpack.c.b16 %v327, %v326
    %v409 = vpack.c.b16 %v329, %v328
    %v410 = vpack.c.b16 %v331, %v330
    %v411 = vpack.c.b16 %v333, %v332
    %v412 = vpack.c.b16 %v335, %v334
    %v413 = vpack.c.b16 %v337, %v336
    %v414 = vpack.c.b16 %v339, %v338
    %v415 = vpack.c.b16 %v341, %v340
    %v416 = vpack.c.b16 %v343, %v342
    %v417 = vpack.c.b16 %v345, %v344
    %v418 = vpack.c.b16 %v347, %v346
    %v419 = vpack.c.b16 %v349, %v348
    %v420 = vpack.c.b16 %v351, %v350
    %v421 = vpack.c.b16 %v353, %v352
    %v422 = vpack.c.b16 %v355, %v354
    %v423 = vpack.c.b16 %v357, %v356
    %v424 = vpack.c.b16 %v359, %v358
    %v425 = vpack.c.b16 %v361, %v360
    %v426 = vpack.c.b16 %v363, %v362
    %v427 = vpack.c.b16 %v365, %v364
    %v428 = vpack.c.b16 %v367, %v366
    %v429 = vpack.c.b16 %v369, %v368
    %v430 = vpack.c.b16 %v371, %v370
    %v431 = vpack.c.b16 %v373, %v372
    %v432 = vpack.c.b16 %v375, %v374
    %v433 = vpack.c.b16 %v377, %v376
    %v434 = vpack.c.b16 %v379, %v378
    %v435 = vpack.c.b16 %v381, %v380
    %v436 = vpack.c.b16 %v383, %v382
    %v437 = vpack.c.b16 %v385, %v384
    %v438 = vpack.c.b16 %v387, %v386
    %v439 = vpack.c.b16 %v389, %v388
    %v440 = vpack.c.b16 %v391, %v390
    %vm490 = vcmask 130048
    %v492 = vsel %vm490, %v93, 0
    %494 = vmatpush.bf16.msra.mxu0 %v399
    %495 = vmatpush.bf16.msra.mxu0 %v398
    %496 = vmatpush.bf16.msra.mxu0 %v397
    %497 = vmatpush.bf16.msra.mxu0 %v396
    %498 = vmatpush.bf16.msra.mxu0 %v395
    %499 = vmatpush.bf16.msra.mxu0 %v394
    %500 = vmatpush.bf16.msra.mxu0 %v393
    %501 = vmatpush.bf16.msra.mxu0 %v392
    %502 = vmatmul.bf16.gmra.mxu0 %v87
    %v503 = vpop.f32.mrf.mxu0
    %v504 = vadd.f32 %v194, %v503
    %v505 = vpop.f32.mrf.mxu0
    %506 = vdwg.mxu0
    %507 = vmatpush.bf16.msra.mxu0 %v407
    %508 = vmatpush.bf16.msra.mxu0 %v406
    %509 = vmatpush.bf16.msra.mxu0 %v405
    %510 = vmatpush.bf16.msra.mxu0 %v404
    %511 = vmatpush.bf16.msra.mxu0 %v403
    %512 = vmatpush.bf16.msra.mxu0 %v402
    %513 = vmatpush.bf16.msra.mxu0 %v401
    %514 = vmatpush.bf16.msra.mxu0 %v400
    %515 = vmatmul.bf16.gmra.mxu0 %v88
    %v516 = vpop.f32.mrf.mxu0
    %v517 = vadd.f32 %v504, %v516
    %v518 = vpop.f32.mrf.mxu0
    %519 = vdwg.mxu0
    %520 = vmatpush.bf16.msra.mxu0 %v415
    %521 = vmatpush.bf16.msra.mxu0 %v414
    %522 = vmatpush.bf16.msra.mxu0 %v413
    %523 = vmatpush.bf16.msra.mxu0 %v412
    %524 = vmatpush.bf16.msra.mxu0 %v411
    %525 = vmatpush.bf16.msra.mxu0 %v410
    %526 = vmatpush.bf16.msra.mxu0 %v409
    %527 = vmatpush.bf16.msra.mxu0 %v408
    %528 = vmatmul.bf16.gmra.mxu0 %v89
    %v529 = vpop.f32.mrf.mxu0
    %v530 = vadd.f32 %v517, %v529
    %v531 = vpop.f32.mrf.mxu0
    %532 = vdwg.mxu0
    %533 = vmatpush.bf16.msra.mxu0 %v423
    %534 = vmatpush.bf16.msra.mxu0 %v422
    %535 = vmatpush.bf16.msra.mxu0 %v421
    %536 = vmatpush.bf16.msra.mxu0 %v420
    %537 = vmatpush.bf16.msra.mxu0 %v419
    %538 = vmatpush.bf16.msra.mxu0 %v418
    %539 = vmatpush.bf16.msra.mxu0 %v417
    %540 = vmatpush.bf16.msra.mxu0 %v416
    %541 = vmatmul.bf16.gmra.mxu0 %v90
    %v542 = vpop.f32.mrf.mxu0
    %v543 = vadd.f32 %v530, %v542
    %v544 = vpop.f32.mrf.mxu0
    %545 = vdwg.mxu0
    %546 = vmatpush.bf16.msra.mxu0 %v431
    %547 = vmatpush.bf16.msra.mxu0 %v430
    %548 = vmatpush.bf16.msra.mxu0 %v429
    %549 = vmatpush.bf16.msra.mxu0 %v428
    %550 = vmatpush.bf16.msra.mxu0 %v427
    %551 = vmatpush.bf16.msra.mxu0 %v426
    %552 = vmatpush.bf16.msra.mxu0 %v425
    %553 = vmatpush.bf16.msra.mxu0 %v424
    %554 = vmatmul.bf16.gmra.mxu0 %v91
    %v555 = vpop.f32.mrf.mxu0
    %v556 = vadd.f32 %v543, %v555
    %v557 = vpop.f32.mrf.mxu0
    %558 = vdwg.mxu0
    %559 = vmatpush.bf16.msra.mxu0 %v439
    %560 = vmatpush.bf16.msra.mxu0 %v438
    %561 = vmatpush.bf16.msra.mxu0 %v437
    %562 = vmatpush.bf16.msra.mxu0 %v436
    %563 = vmatpush.bf16.msra.mxu0 %v435
    %564 = vmatpush.bf16.msra.mxu0 %v434
    %565 = vmatpush.bf16.msra.mxu0 %v433
    %566 = vmatpush.bf16.msra.mxu0 %v432
    %567 = vmatmul.bf16.gmra.mxu0 %v92
    %v568 = vpop.f32.mrf.mxu0
    %v569 = vadd.f32 %v556, %v568
    %v570 = vpop.f32.mrf.mxu0
    %571 = vdwg.mxu0
    %572 = vmatpush.bf16.msra.mxu0 0
    %573 = vmatpush.bf16.msra.mxu0 0
    %574 = vmatpush.bf16.msra.mxu0 0
    %575 = vmatpush.bf16.msra.mxu0 0
    %576 = vmatpush.bf16.msra.mxu0 0
    %577 = vmatpush.bf16.msra.mxu0 0
    %578 = vmatpush.bf16.msra.mxu0 0
    %579 = vmatpush.bf16.msra.mxu0 %v440
    %580 = vmatmul.bf16.gmra.mxu0 %v492
    %v581 = vpop.f32.mrf.mxu0
    %v582 = vadd.f32 %v569, %v581
    %v583 = vpop.f32.mrf.mxu0
    %584 = vdwg.mxu0
    %v585 = vtanh.pop %v582
    %v586 = vpack.c.bf16 %v585, %v585
    %v587 = vld [vmem:[%s3] sm:$0xf]
    %v588 = vld [vmem:[%s3 + $0x4] sm:$0xf]
    %v589 = vld [vmem:[%s3 + $0x8] sm:$0xf]
    %v590 = vld [vmem:[%s3 + $0xc] sm:$0xf]
    %v591 = vld [vmem:[%s3 + $0x10] sm:$0xf]
    %v592 = vld [vmem:[%s3 + $0x14] sm:$0xf]
    %v593 = vld [vmem:[%s3 + $0x18] sm:$0xf]
    %v594 = vld [vmem:[%s3 + $0x1c] sm:$0xf]
    %v595 = vld [vmem:[%s3 + $0x20] sm:$0xf]
    %v596 = vld [vmem:[%s3 + $0x24] sm:$0xf]
    %v597 = vld [vmem:[%s3 + $0x28] sm:$0xf]
    %v598 = vld [vmem:[%s3 + $0x2c] sm:$0xf]
    %v599 = vld [vmem:[%s3 + $0x30] sm:$0xf]
    %v600 = vld [vmem:[%s3 + $0x34] sm:$0xf]
    %v601 = vld [vmem:[%s3 + $0x38] sm:$0xf]
    %v602 = vld [vmem:[%s3 + $0x3c] sm:$0xf]
    %v603 = vld [vmem:[%s4] sm:$0x1]
    %v605 = vperm.slane %v603, 0
    %v623 = vunpack.c.l.b16 %v587
    %v624 = vunpack.c.l.b16 %v588
    %v625 = vunpack.c.l.b16 %v589
    %v626 = vunpack.c.l.b16 %v590
    %v627 = vunpack.c.l.b16 %v591
    %v628 = vunpack.c.l.b16 %v592
    %v629 = vunpack.c.l.b16 %v593
    %v630 = vunpack.c.l.b16 %v594
    %v631 = vunpack.c.l.b16 %v595
    %v632 = vunpack.c.l.b16 %v596
    %v633 = vunpack.c.l.b16 %v597
    %v634 = vunpack.c.l.b16 %v598
    %v635 = vunpack.c.l.b16 %v599
    %v636 = vunpack.c.l.b16 %v600
    %v637 = vunpack.c.l.b16 %v601
    %v638 = vunpack.c.l.b16 %v602
    %v639 = vpack.c.b16 %v624, %v623
    %v640 = vpack.c.b16 %v626, %v625
    %v641 = vpack.c.b16 %v628, %v627
    %v642 = vpack.c.b16 %v630, %v629
    %v643 = vpack.c.b16 %v632, %v631
    %v644 = vpack.c.b16 %v634, %v633
    %v645 = vpack.c.b16 %v636, %v635
    %v646 = vpack.c.b16 %v638, %v637
    %655 = vmatpush.bf16.msra.mxu0 %v646
    %656 = vmatpush.bf16.msra.mxu0 %v645
    %657 = vmatpush.bf16.msra.mxu0 %v644
    %658 = vmatpush.bf16.msra.mxu0 %v643
    %659 = vmatpush.bf16.msra.mxu0 %v642
    %660 = vmatpush.bf16.msra.mxu0 %v641
    %661 = vmatpush.bf16.msra.mxu0 %v640
    %662 = vmatpush.bf16.msra.mxu0 %v639
    %663 = vmatmul.bf16.gmra.mxu0 %v586
    %v664 = vpop.f32.mrf.mxu0
    %v665 = vadd.f32 %v605, %v664
    %v666 = vpop.f32.mrf.mxu0
    %667 = vdwg.mxu0
    %v668 = vtanh.pop %v665
    %v669 = vpack.c.bf16 %v668, %v668
    %v670 = vld [vmem:[#allocation4] sm:$0xf]
    %v671 = vld [vmem:[#allocation4 + $0x4] sm:$0xf]
    %v672 = vld [vmem:[#allocation4 + $0x8] sm:$0xf]
    %v673 = vld [vmem:[#allocation4 + $0xc] sm:$0xf]
    %v674 = vld [vmem:[#allocation4 + $0x10] sm:$0xf]
    %v675 = vld [vmem:[#allocation4 + $0x14] sm:$0xf]
    %v676 = vld [vmem:[#allocation4 + $0x18] sm:$0xf]
    %v677 = vld [vmem:[#allocation4 + $0x1c] sm:$0xf]
    %v678 = vld [vmem:[#allocation4 + $0x20] sm:$0xf]
    %v679 = vld [vmem:[#allocation4 + $0x24] sm:$0xf]
    %v680 = vld [vmem:[#allocation4 + $0x28] sm:$0xf]
    %v681 = vld [vmem:[#allocation4 + $0x2c] sm:$0xf]
    %v682 = vld [vmem:[#allocation4 + $0x30] sm:$0xf]
    %v683 = vld [vmem:[#allocation4 + $0x34] sm:$0xf]
    %v684 = vld [vmem:[#allocation4 + $0x38] sm:$0xf]
    %v685 = vld [vmem:[#allocation4 + $0x3c] sm:$0xf]
    %v686 = vld [vmem:[%s6] sm:$0x1]
    %v688 = vperm.slane %v686, 0
    %v706 = vunpack.c.l.b16 %v670
    %v707 = vunpack.c.l.b16 %v671
    %v708 = vunpack.c.l.b16 %v672
    %v709 = vunpack.c.l.b16 %v673
    %v710 = vunpack.c.l.b16 %v674
    %v711 = vunpack.c.l.b16 %v675
    %v712 = vunpack.c.l.b16 %v676
    %v713 = vunpack.c.l.b16 %v677
    %v714 = vunpack.c.l.b16 %v678
    %v715 = vunpack.c.l.b16 %v679
    %v716 = vunpack.c.l.b16 %v680
    %v717 = vunpack.c.l.b16 %v681
    %v718 = vunpack.c.l.b16 %v682
    %v719 = vunpack.c.l.b16 %v683
    %v720 = vunpack.c.l.b16 %v684
    %v721 = vunpack.c.l.b16 %v685
    %v722 = vpack.c.b16 %v707, %v706
    %v723 = vpack.c.b16 %v709, %v708
    %v724 = vpack.c.b16 %v711, %v710
    %v725 = vpack.c.b16 %v713, %v712
    %v726 = vpack.c.b16 %v715, %v714
    %v727 = vpack.c.b16 %v717, %v716
    %v728 = vpack.c.b16 %v719, %v718
    %v729 = vpack.c.b16 %v721, %v720
    %738 = vmatpush.bf16.msra.mxu0 %v729
    %739 = vmatpush.bf16.msra.mxu0 %v728
    %740 = vmatpush.bf16.msra.mxu0 %v727
    %741 = vmatpush.bf16.msra.mxu0 %v726
    %742 = vmatpush.bf16.msra.mxu0 %v725
    %743 = vmatpush.bf16.msra.mxu0 %v724
    %744 = vmatpush.bf16.msra.mxu0 %v723
    %745 = vmatpush.bf16.msra.mxu0 %v722
    %746 = vmatmul.bf16.gmra.mxu0 %v669
    %v747 = vpop.f32.mrf.mxu0
    %v748 = vadd.f32 %v688, %v747
    %v749 = vpop.f32.mrf.mxu0
    %750 = vdwg.mxu0
    %v751 = vtanh.pop %v748
    %v752 = vpack.c.bf16 %v751, %v751
    %v753 = vld [vmem:[#allocation6] sm:$0xf]
    %v754 = vld [vmem:[#allocation6 + $0x4] sm:$0xf]
    %v755 = vld [vmem:[#allocation6 + $0x8] sm:$0xf]
    %v756 = vld [vmem:[#allocation6 + $0xc] sm:$0xf]
    %v757 = vld [vmem:[#allocation6 + $0x10] sm:$0xf]
    %v758 = vld [vmem:[#allocation6 + $0x14] sm:$0xf]
    %v759 = vld [vmem:[#allocation6 + $0x18] sm:$0xf]
    %v760 = vld [vmem:[#allocation6 + $0x1c] sm:$0xf]
    %v761 = vld [vmem:[#allocation6 + $0x20] sm:$0xf]
    %v762 = vld [vmem:[#allocation6 + $0x24] sm:$0xf]
    %v763 = vld [vmem:[#allocation6 + $0x28] sm:$0xf]
    %v764 = vld [vmem:[#allocation6 + $0x2c] sm:$0xf]
    %v765 = vld [vmem:[#allocation6 + $0x30] sm:$0xf]
    %v766 = vld [vmem:[#allocation6 + $0x34] sm:$0xf]
    %v767 = vld [vmem:[#allocation6 + $0x38] sm:$0xf]
    %v768 = vld [vmem:[#allocation6 + $0x3c] sm:$0xf]
    %v769 = vld [vmem:[%s8] sm:$0x1]
    %v771 = vperm.slane %v769, 0
    %v789 = vunpack.c.l.b16 %v753
    %v790 = vunpack.c.l.b16 %v754
    %v791 = vunpack.c.l.b16 %v755
    %v792 = vunpack.c.l.b16 %v756
    %v793 = vunpack.c.l.b16 %v757
    %v794 = vunpack.c.l.b16 %v758
    %v795 = vunpack.c.l.b16 %v759
    %v796 = vunpack.c.l.b16 %v760
    %v797 = vunpack.c.l.b16 %v761
    %v798 = vunpack.c.l.b16 %v762
    %v799 = vunpack.c.l.b16 %v763
    %v800 = vunpack.c.l.b16 %v764
    %v801 = vunpack.c.l.b16 %v765
    %v802 = vunpack.c.l.b16 %v766
    %v803 = vunpack.c.l.b16 %v767
    %v804 = vunpack.c.l.b16 %v768
    %v805 = vpack.c.b16 %v790, %v789
    %v806 = vpack.c.b16 %v792, %v791
    %v807 = vpack.c.b16 %v794, %v793
    %v808 = vpack.c.b16 %v796, %v795
    %v809 = vpack.c.b16 %v798, %v797
    %v810 = vpack.c.b16 %v800, %v799
    %v811 = vpack.c.b16 %v802, %v801
    %v812 = vpack.c.b16 %v804, %v803
    %821 = vmatpush.bf16.msra.mxu0 %v812
    %822 = vmatpush.bf16.msra.mxu0 %v811
    %823 = vmatpush.bf16.msra.mxu0 %v810
    %824 = vmatpush.bf16.msra.mxu0 %v809
    %825 = vmatpush.bf16.msra.mxu0 %v808
    %826 = vmatpush.bf16.msra.mxu0 %v807
    %827 = vmatpush.bf16.msra.mxu0 %v806
    %828 = vmatpush.bf16.msra.mxu0 %v805
    %829 = vmatmul.bf16.gmra.mxu0 %v752
    %v830 = vpop.f32.mrf.mxu0
    %v831 = vadd.f32 %v771, %v830
    %v832 = vpop.f32.mrf.mxu0
    %833 = vdwg.mxu0
    %v834 = vpack.c.bf16 %v831, %v831
    %835 = vst [vmem:[%s9] sm:$0xf] %v834
    // Predicated region
    $region50: #{_forward_jit.1} parent=1 // pred_check
      _
    $region51: #{_forward_jit.1} parent=1 // pred_check_branch
      %837 = sbr.rel (0) target = $region53
    $region52: #{_forward_jit.1} parent=1 // pred_region
      _
    $region53: #{_forward_jit.1} parent=1 // pred_fallthru
      _
    // Predicated region
    $region54: #{_forward_jit.1} parent=1 // pred_check
      _
    $region55: #{_forward_jit.1} parent=1 // pred_check_branch
      %839 = sbr.rel (0) target = $region57
    $region56: #{_forward_jit.1} parent=1 // pred_region
      _
    $region57: #{_forward_jit.1} parent=1 // pred_fallthru
      _
    %840 = vsyncpa [#allocation3], 1
    %841 = vsyncpa [#allocation5], 1

</llo_original>
